<compile_context>
chip_gen: v5e
topology: v5e:2x2
jax: 0.10.0
libtpu: 0.0.40
codegen_flags: <defaults>
</compile_context>

<pallas_src>
from functools import partial

import jax
import jax.numpy as jnp
from jax.experimental import pallas as pl
from jax.experimental.pallas import tpu as pltpu

# ----------------------------------------------------------------------------
# Problem sizes (small, consistent with the module's forward).
# ----------------------------------------------------------------------------
SAMPLE_NUM = 4          # must be even (probe/gallery pairs)
SEQ_LEN    = 8
INPUT_NUM  = 64         # D
INPLANES   = 128
OUTPUT_NUM = 128        # O
BN_EPS     = 1e-5

_VMEM = pl.BlockSpec(memory_space=pltpu.MemorySpace.VMEM)


# ----------------------------------------------------------------------------
# Fused Pallas kernel: the entire AttModule.forward in one launch.
# ----------------------------------------------------------------------------
def _att_fused_kernel(x_ref, raw_ref, w_ref, t_ref, out_ref, *,
                      pairs, seq_len, out_dim):
    P, S, O = pairs, seq_len, out_dim

    x = x_ref[...]                       # (2P*S, D)
    raw = raw_ref[...]                   # (2P*S, D)

    # ---- value projection: feat_fc folded into one affine map (exact, eval) --
    v = (jnp.dot(x, w_ref[:, 0:O], preferred_element_type=jnp.float32)
         + t_ref[:, 0:O])                                            # (2P*S, O)

    # ---- fused featQ|featK projection: one 256-wide matmul on raw frames -----
    proj = (jnp.dot(raw, w_ref[:, O:3 * O], preferred_element_type=jnp.float32)
            + t_ref[:, O:3 * O])                                      # (2P*S, 2O)
    q_all = proj[:, 0:O]                 # per-frame featQ   (lane-aligned slice)
    k_all = proj[:, O:2 * O]             # per-frame featK   (lane-aligned slice)

    # ---- probe / gallery split (interleaved pairs), tile-aligned reshapes ----
    v4 = v.reshape(P, 2, S, O)
    k4 = k_all.reshape(P, 2, S, O)
    q4 = q_all.reshape(P, 2, S, O)
    v_probe, v_gallery = v4[:, 0], v4[:, 1]          # (P, S, O)
    k_probe, k_gallery = k4[:, 0], k4[:, 1]          # (P, S, O)
    # pooled query = featQ(temporal mean) == mean of per-frame featQ (affine)
    q_probe = jnp.mean(q4[:, 0], axis=1, keepdims=True)      # (P, 1, O)
    q_gallery = jnp.mean(q4[:, 1], axis=1, keepdims=True)    # (P, 1, O)

    def _softmax_last(s):
        m = jnp.max(s, axis=-1, keepdims=True)
        e = jnp.exp(s - m)
        return e * pl.reciprocal(jnp.sum(e, axis=-1, keepdims=True), approx=True)

    # ---- self attention pooling (scores + weighted sums on the MXU) ----------
    def _self_pool(q, k_, v_):
        # q: (P,1,O); k_, v_: (P,S,O) -> (P,O)
        s = jnp.einsum('pqo,pso->pqs', q, k_, preferred_element_type=jnp.float32)
        a = _softmax_last(s)                                          # (P,1,S)
        o = jnp.einsum('pqs,pso->pqo', a, v_, preferred_element_type=jnp.float32)
        return o[:, 0, :]                                             # (P,O)

    pooled_probe = _self_pool(q_probe, k_probe, v_probe)              # (P,O)
    pooled_gallery = _self_pool(q_gallery, k_gallery, v_gallery)      # (P,O)

    # ---- mutual attention pooling, emitted directly in (probe, gallery, O) ---
    # pooled_gallery_2[p,g] = sum_s softmax_s(pooled_probe[p].k_gallery[g,s]) * v_gallery[g,s]
    s_pg = jnp.einsum('po,gso->pgs', pooled_probe, k_gallery,
                      preferred_element_type=jnp.float32)             # (P,G,S)
    a_pg = _softmax_last(s_pg)
    pooled_gallery_2 = jnp.sum(a_pg[..., None] * v_gallery[None, :, :, :],
                               axis=2)                                # (P,G,O)

    # pooled_probe_2[p,g] = sum_s softmax_s(pooled_gallery[g].k_probe[p,s]) * v_probe[p,s]
    # (mutualpooling(probe, pooled_gallery).permute(1,0,2) done in place)
    qg_b = jnp.broadcast_to(pooled_gallery[None, :, :], (P, P, O))    # (P,G,O)
    s_gp = jnp.einsum('pgo,pso->pgs', qg_b, k_probe,
                      preferred_element_type=jnp.float32)             # (P,G,S)
    a_gp = _softmax_last(s_gp)
    pooled_probe_2 = jnp.sum(a_gp[..., None] * v_probe[:, None, :, :],
                             axis=2)                                  # (P,G,O)

    # ---- single lane-dense output slab (one writeback DMA) -------------------
    row = 0
    out_ref[row:row + P, :] = pooled_probe
    row += P
    for pi in range(P):                                   # static unroll
        out_ref[row:row + P, :] = pooled_gallery_2[pi]
        row += P
    for pi in range(P):
        out_ref[row:row + P, :] = pooled_probe_2[pi]
        row += P
    out_ref[row:row + P, :] = pooled_gallery
    row += P
    pad = out_ref.shape[0] - row
    if pad:
        out_ref[row:, :] = jnp.zeros((pad, O), jnp.float32)


def _fused_forward(x2, raw2, p, pairs, seq_len):
    n_rows, D = x2.shape
    O = OUTPUT_NUM
    used_rows = 2 * pairs + 2 * pairs * pairs
    slab_rows = ((used_rows + 7) // 8) * 8

    # Advisory cost hint so XLA can overlap this tiny kernel with neighbours.
    flops = (2 * n_rows * D * O              # value projection
             + 2 * n_rows * D * (2 * O)      # fused Q|K projection
             + 8 * pairs * pairs * seq_len * O)   # attention (scores + weighted sums)
    transcendentals = (2 * pairs * seq_len + 2 * pairs * pairs * seq_len
                       + 2 * pairs + 2 * pairs * pairs)
    bytes_accessed = (2 * n_rows * D + D * 3 * O + 3 * O + slab_rows * O) * 4

    kernel = partial(_att_fused_kernel, pairs=pairs, seq_len=seq_len, out_dim=O)
    return pl.pallas_call(
        kernel,
        out_shape=jax.ShapeDtypeStruct((slab_rows, O), jnp.float32),
        in_specs=[_VMEM] * 4,
        out_specs=_VMEM,
        cost_estimate=pl.CostEstimate(flops=flops,
                                      transcendentals=transcendentals,
                                      bytes_accessed=bytes_accessed),
    )(x2, raw2, p['W'], p['T'])


# ----------------------------------------------------------------------------
# Parameter construction (mirrors the PyTorch __init__), eval-mode BN folded
# and affine layers composed / concatenated on the host.
# ----------------------------------------------------------------------------
def _kaiming_fan_out(key, out_features, in_features):
    # init.kaiming_normal_(W, mode='fan_out'): std = sqrt(2 / fan_out)
    std = jnp.sqrt(2.0 / out_features)
    w = std * jax.random.normal(key, (out_features, in_features), jnp.float32)
    return w.T                                    # stored pre-transposed (in, out)


def _fold_linear_bn(w, b, gamma, beta, mean, var, eps=BN_EPS):
    """Fold eval-mode BatchNorm1d into the preceding Linear: y = x @ w' + t'."""
    scale = gamma / jnp.sqrt(var + eps)           # (out,)
    w_f = w * scale[None, :]                      # (in, out)
    t_f = ((b - mean) * scale + beta)[None, :]    # (1, out)
    return w_f, t_f


def init_params(key):
    k1, k2, k3, k4 = jax.random.split(key, 4)

    def ident_bn(n):
        # gamma=1, beta=0, running_mean=0, running_var=1 (as at PyTorch init)
        return (jnp.ones((n,), jnp.float32), jnp.zeros((n,), jnp.float32),
                jnp.zeros((n,), jnp.float32), jnp.ones((n,), jnp.float32))

    w1, t1 = _fold_linear_bn(_kaiming_fan_out(k1, INPLANES, INPUT_NUM),
                             jnp.zeros((INPLANES,), jnp.float32), *ident_bn(INPLANES))
    w2, t2 = _fold_linear_bn(_kaiming_fan_out(k2, OUTPUT_NUM, INPLANES),
                             jnp.zeros((OUTPUT_NUM,), jnp.float32), *ident_bn(OUTPUT_NUM))
    wq, tq = _fold_linear_bn(_kaiming_fan_out(k3, OUTPUT_NUM, INPUT_NUM),
                             jnp.zeros((OUTPUT_NUM,), jnp.float32), *ident_bn(OUTPUT_NUM))
    wk, tk = _fold_linear_bn(_kaiming_fan_out(k4, OUTPUT_NUM, INPUT_NUM),
                             jnp.zeros((OUTPUT_NUM,), jnp.float32), *ident_bn(OUTPUT_NUM))

    # Compose feat_fc's two affine layers (exact in eval mode, no nonlinearity).
    w12 = w1 @ w2                                 # (D, O)
    t12 = t1 @ w2 + t2                            # (1, O)

    # Pack everything into two buffers: W = [w12 | wq | wk], T = [t12 | tq | tk].
    W = jnp.concatenate([w12, wq, wk], axis=1)    # (D, 3*O)
    T = jnp.concatenate([t12, tq, tk], axis=1)    # (1, 3*O)
    return {'W': W, 'T': T}


# ----------------------------------------------------------------------------
# AttModule.forward (eval mode: dropout=0 default -> dropout branch never taken)
# ----------------------------------------------------------------------------
@jax.jit
def att_module_forward(x, raw_x, params):
    sample_num, seq_len, D = x.shape
    if sample_num % 2 != 0:
        raise RuntimeError('the batch size should be even number!')
    P = sample_num // 2
    O = OUTPUT_NUM

    # Contiguous flattens are metadata-only in XLA; everything else is one kernel.
    x2 = x.reshape(sample_num * seq_len, D)
    raw2 = raw_x.reshape(sample_num * seq_len, D)

    slab = _fused_forward(x2, raw2, params, P, seq_len)   # (16, 128) result slab

    r = 0
    pooled_probe = slab[r:r + P];                      r += P
    pooled_gallery_2 = slab[r:r + P * P].reshape(P, P, O); r += P * P
    pooled_probe_2 = slab[r:r + P * P].reshape(P, P, O);   r += P * P
    pooled_gallery = slab[r:r + P]

    # unsqueeze(1) / unsqueeze(0) — metadata-only reshapes.
    return (pooled_probe[:, None, :],        # (P, 1, O)
            pooled_gallery_2,                # (P, G, O)
            pooled_probe_2,                  # (P, G, O)  (already permuted in-kernel)
            pooled_gallery[None, :, :])      # (1, G, O)


# ----------------------------------------------------------------------------
if __name__ == "__main__":
    key = jax.random.PRNGKey(0)
    k_params, k_x, k_raw = jax.random.split(key, 3)

    params = init_params(k_params)
    x = jax.random.normal(k_x, (SAMPLE_NUM, SEQ_LEN, INPUT_NUM), jnp.float32)
    raw_x = jax.random.normal(k_raw, (SAMPLE_NUM, SEQ_LEN, INPUT_NUM), jnp.float32)

    outs = att_module_forward(x, raw_x, params)
    outs = jax.block_until_ready(outs)

    P = SAMPLE_NUM // 2
    assert outs[0].shape == (P, 1, OUTPUT_NUM)
    assert outs[1].shape == (P, P, OUTPUT_NUM)
    assert outs[2].shape == (P, P, OUTPUT_NUM)
    assert outs[3].shape == (1, P, OUTPUT_NUM)
    assert all(bool(jnp.all(jnp.isfinite(o))) for o in outs)

    print("KERNEL_OK")
</pallas_src>

<mosaic_0001>
module attributes {stable_mosaic.version = 11 : i64} {
  func.func @_att_fused_kernel(%arg0: memref<32x64xf32, #tpu.memory_space<vmem>>, %arg1: memref<32x64xf32, #tpu.memory_space<vmem>>, %arg2: memref<64x384xf32, #tpu.memory_space<vmem>>, %arg3: memref<1x384xf32, #tpu.memory_space<vmem>>, %arg4: memref<16x128xf32, #tpu.memory_space<vmem>>) attributes {dimension_semantics = [], scalar_prefetch = 0 : i64, scratch_operands = 0 : i64, tpu.core_type = #tpu.core_type<tc>} {
    %c0 = arith.constant 0 : index
    %c0_0 = arith.constant 0 : index
    %0 = vector.load %arg0[%c0, %c0_0] : memref<32x64xf32, #tpu.memory_space<vmem>>, vector<32x64xf32>
    %c0_1 = arith.constant 0 : index
    %c0_2 = arith.constant 0 : index
    %1 = vector.load %arg1[%c0_1, %c0_2] : memref<32x64xf32, #tpu.memory_space<vmem>>, vector<32x64xf32>
    %c0_3 = arith.constant 0 : index
    %c0_4 = arith.constant 0 : index
    %2 = vector.load %arg2[%c0_3, %c0_4] : memref<64x384xf32, #tpu.memory_space<vmem>>, vector<64x128xf32>
    %cst = arith.constant dense<0.000000e+00> : vector<32x128xf32>
    %3 = tpu.matmul %0, %2, %cst {dimension_numbers = #tpu.dot_dimension_numbers<[1], [0], [0], [1], [0, 0, 1, 1], [], []>} : vector<32x64xf32>, vector<64x128xf32>, vector<32x128xf32> -> vector<32x128xf32>
    %c0_5 = arith.constant 0 : index
    %c0_6 = arith.constant 0 : index
    %4 = vector.load %arg3[%c0_5, %c0_6] : memref<1x384xf32, #tpu.memory_space<vmem>>, vector<1x128xf32>
    %5 = vector.broadcast %4 : vector<1x128xf32> to vector<32x128xf32>
    %6 = arith.addf %3, %5 : vector<32x128xf32>
    %c0_7 = arith.constant 0 : index
    %c128 = arith.constant 128 : index
    %7 = vector.load %arg2[%c0_7, %c128] : memref<64x384xf32, #tpu.memory_space<vmem>>, vector<64x256xf32>
    %cst_8 = arith.constant dense<0.000000e+00> : vector<32x256xf32>
    %8 = tpu.matmul %1, %7, %cst_8 {dimension_numbers = #tpu.dot_dimension_numbers<[1], [0], [0], [1], [0, 0, 1, 1], [], []>} : vector<32x64xf32>, vector<64x256xf32>, vector<32x256xf32> -> vector<32x256xf32>
    %c0_9 = arith.constant 0 : index
    %c128_10 = arith.constant 128 : index
    %9 = vector.load %arg3[%c0_9, %c128_10] : memref<1x384xf32, #tpu.memory_space<vmem>>, vector<1x256xf32>
    %10 = vector.broadcast %9 : vector<1x256xf32> to vector<32x256xf32>
    %11 = arith.addf %8, %10 : vector<32x256xf32>
    %12 = vector.extract_strided_slice %11 {offsets = [0, 0], sizes = [32, 128], strides = [1, 1]} : vector<32x256xf32> to vector<32x128xf32>
    %13 = vector.extract_strided_slice %11 {offsets = [0, 128], sizes = [32, 128], strides = [1, 1]} : vector<32x256xf32> to vector<32x128xf32>
    %14 = vector.shape_cast %6 : vector<32x128xf32> to vector<2x2x8x128xf32>
    %15 = vector.shape_cast %13 : vector<32x128xf32> to vector<2x2x8x128xf32>
    %16 = vector.shape_cast %12 : vector<32x128xf32> to vector<2x2x8x128xf32>
    %17 = vector.extract_strided_slice %14 {offsets = [0, 0, 0, 0], sizes = [2, 1, 8, 128], strides = [1, 1, 1, 1]} : vector<2x2x8x128xf32> to vector<2x1x8x128xf32>
    %18 = vector.shape_cast %17 : vector<2x1x8x128xf32> to vector<2x8x128xf32>
    %19 = vector.extract_strided_slice %14 {offsets = [0, 1, 0, 0], sizes = [2, 1, 8, 128], strides = [1, 1, 1, 1]} : vector<2x2x8x128xf32> to vector<2x1x8x128xf32>
    %20 = vector.shape_cast %19 : vector<2x1x8x128xf32> to vector<2x8x128xf32>
    %21 = vector.extract_strided_slice %15 {offsets = [0, 0, 0, 0], sizes = [2, 1, 8, 128], strides = [1, 1, 1, 1]} : vector<2x2x8x128xf32> to vector<2x1x8x128xf32>
    %22 = vector.shape_cast %21 : vector<2x1x8x128xf32> to vector<2x8x128xf32>
    %23 = vector.extract_strided_slice %15 {offsets = [0, 1, 0, 0], sizes = [2, 1, 8, 128], strides = [1, 1, 1, 1]} : vector<2x2x8x128xf32> to vector<2x1x8x128xf32>
    %24 = vector.shape_cast %23 : vector<2x1x8x128xf32> to vector<2x8x128xf32>
    %25 = vector.extract_strided_slice %16 {offsets = [0, 0, 0, 0], sizes = [2, 1, 8, 128], strides = [1, 1, 1, 1]} : vector<2x2x8x128xf32> to vector<2x1x8x128xf32>
    %26 = vector.shape_cast %25 : vector<2x1x8x128xf32> to vector<2x8x128xf32>
    %cst_11 = arith.constant dense<0.000000e+00> : vector<2x128xf32>
    %27 = vector.multi_reduction <add>, %26, %cst_11 [1] : vector<2x8x128xf32> to vector<2x128xf32>
    %28 = vector.shape_cast %27 : vector<2x128xf32> to vector<2x1x128xf32>
    %cst_12 = arith.constant 8.000000e+00 : f32
    %29 = vector.broadcast %cst_12 : f32 to vector<2x1x128xf32>
    %30 = arith.divf %28, %29 : vector<2x1x128xf32>
    %31 = vector.extract_strided_slice %16 {offsets = [0, 1, 0, 0], sizes = [2, 1, 8, 128], strides = [1, 1, 1, 1]} : vector<2x2x8x128xf32> to vector<2x1x8x128xf32>
    %32 = vector.shape_cast %31 : vector<2x1x8x128xf32> to vector<2x8x128xf32>
    %cst_13 = arith.constant dense<0.000000e+00> : vector<2x128xf32>
    %33 = vector.multi_reduction <add>, %32, %cst_13 [1] : vector<2x8x128xf32> to vector<2x128xf32>
    %34 = vector.shape_cast %33 : vector<2x128xf32> to vector<2x1x128xf32>
    %cst_14 = arith.constant 8.000000e+00 : f32
    %35 = vector.broadcast %cst_14 : f32 to vector<2x1x128xf32>
    %36 = arith.divf %34, %35 : vector<2x1x128xf32>
    "tpu.trace_start"() <{level = 10 : i32, message = "pqo,pso->pqs"}> : () -> ()
    %cst_15 = arith.constant dense<0.000000e+00> : vector<2x1x8xf32>
    %37 = tpu.matmul %30, %22, %cst_15 {dimension_numbers = #tpu.dot_dimension_numbers<[2], [2], [1], [1], [0, 0, 0, 1, 1, 1], [0], [0]>} : vector<2x1x128xf32>, vector<2x8x128xf32>, vector<2x1x8xf32> -> vector<2x1x8xf32>
    "tpu.trace_stop"() : () -> ()
    %cst_16 = arith.constant dense<0xFF800000> : vector<2x1xf32>
    %38 = vector.multi_reduction <maximumf>, %37, %cst_16 [2] : vector<2x1x8xf32> to vector<2x1xf32>
    %39 = vector.shape_cast %38 : vector<2x1xf32> to vector<2x1x1xf32>
    %40 = vector.broadcast %39 : vector<2x1x1xf32> to vector<2x1x8xf32>
    %41 = arith.subf %37, %40 : vector<2x1x8xf32>
    %42 = math.exp %41 : vector<2x1x8xf32>
    %cst_17 = arith.constant dense<0.000000e+00> : vector<2x1xf32>
    %43 = vector.multi_reduction <add>, %42, %cst_17 [2] : vector<2x1x8xf32> to vector<2x1xf32>
    %44 = vector.shape_cast %43 : vector<2x1xf32> to vector<2x1x1xf32>
    %45 = tpu.reciprocal %44 {approx = true} : vector<2x1x1xf32> -> vector<2x1x1xf32>
    %46 = vector.broadcast %45 : vector<2x1x1xf32> to vector<2x1x8xf32>
    %47 = arith.mulf %42, %46 : vector<2x1x8xf32>
    "tpu.trace_start"() <{level = 10 : i32, message = "pqs,pso->pqo"}> : () -> ()
    %cst_18 = arith.constant dense<0.000000e+00> : vector<2x1x128xf32>
    %48 = tpu.matmul %47, %18, %cst_18 {dimension_numbers = #tpu.dot_dimension_numbers<[2], [1], [1], [2], [0, 0, 0, 1, 1, 2], [0], [0]>} : vector<2x1x8xf32>, vector<2x8x128xf32>, vector<2x1x128xf32> -> vector<2x1x128xf32>
    "tpu.trace_stop"() : () -> ()
    %49 = vector.shape_cast %48 : vector<2x1x128xf32> to vector<2x128xf32>
    "tpu.trace_start"() <{level = 10 : i32, message = "pqo,pso->pqs"}> : () -> ()
    %cst_19 = arith.constant dense<0.000000e+00> : vector<2x1x8xf32>
    %50 = tpu.matmul %36, %24, %cst_19 {dimension_numbers = #tpu.dot_dimension_numbers<[2], [2], [1], [1], [0, 0, 0, 1, 1, 1], [0], [0]>} : vector<2x1x128xf32>, vector<2x8x128xf32>, vector<2x1x8xf32> -> vector<2x1x8xf32>
    "tpu.trace_stop"() : () -> ()
    %cst_20 = arith.constant dense<0xFF800000> : vector<2x1xf32>
    %51 = vector.multi_reduction <maximumf>, %50, %cst_20 [2] : vector<2x1x8xf32> to vector<2x1xf32>
    %52 = vector.shape_cast %51 : vector<2x1xf32> to vector<2x1x1xf32>
    %53 = vector.broadcast %52 : vector<2x1x1xf32> to vector<2x1x8xf32>
    %54 = arith.subf %50, %53 : vector<2x1x8xf32>
    %55 = math.exp %54 : vector<2x1x8xf32>
    %cst_21 = arith.constant dense<0.000000e+00> : vector<2x1xf32>
    %56 = vector.multi_reduction <add>, %55, %cst_21 [2] : vector<2x1x8xf32> to vector<2x1xf32>
    %57 = vector.shape_cast %56 : vector<2x1xf32> to vector<2x1x1xf32>
    %58 = tpu.reciprocal %57 {approx = true} : vector<2x1x1xf32> -> vector<2x1x1xf32>
    %59 = vector.broadcast %58 : vector<2x1x1xf32> to vector<2x1x8xf32>
    %60 = arith.mulf %55, %59 : vector<2x1x8xf32>
    "tpu.trace_start"() <{level = 10 : i32, message = "pqs,pso->pqo"}> : () -> ()
    %cst_22 = arith.constant dense<0.000000e+00> : vector<2x1x128xf32>
    %61 = tpu.matmul %60, %20, %cst_22 {dimension_numbers = #tpu.dot_dimension_numbers<[2], [1], [1], [2], [0, 0, 0, 1, 1, 2], [0], [0]>} : vector<2x1x8xf32>, vector<2x8x128xf32>, vector<2x1x128xf32> -> vector<2x1x128xf32>
    "tpu.trace_stop"() : () -> ()
    %62 = vector.shape_cast %61 : vector<2x1x128xf32> to vector<2x128xf32>
    "tpu.trace_start"() <{level = 10 : i32, message = "po,gso->pgs"}> : () -> ()
    %cst_23 = arith.constant dense<0.000000e+00> : vector<2x2x8xf32>
    %63 = tpu.matmul %49, %24, %cst_23 {dimension_numbers = #tpu.dot_dimension_numbers<[1], [2], [0], [0, 1], [0, 0, 1, 0, 1, 1], [], []>} : vector<2x128xf32>, vector<2x8x128xf32>, vector<2x2x8xf32> -> vector<2x2x8xf32>
    "tpu.trace_stop"() : () -> ()
    %cst_24 = arith.constant dense<0xFF800000> : vector<2x2xf32>
    %64 = vector.multi_reduction <maximumf>, %63, %cst_24 [2] : vector<2x2x8xf32> to vector<2x2xf32>
    %65 = vector.shape_cast %64 : vector<2x2xf32> to vector<2x2x1xf32>
    %66 = vector.broadcast %65 : vector<2x2x1xf32> to vector<2x2x8xf32>
    %67 = arith.subf %63, %66 : vector<2x2x8xf32>
    %68 = math.exp %67 : vector<2x2x8xf32>
    %cst_25 = arith.constant dense<0.000000e+00> : vector<2x2xf32>
    %69 = vector.multi_reduction <add>, %68, %cst_25 [2] : vector<2x2x8xf32> to vector<2x2xf32>
    %70 = vector.shape_cast %69 : vector<2x2xf32> to vector<2x2x1xf32>
    %71 = tpu.reciprocal %70 {approx = true} : vector<2x2x1xf32> -> vector<2x2x1xf32>
    %72 = vector.broadcast %71 : vector<2x2x1xf32> to vector<2x2x8xf32>
    %73 = arith.mulf %68, %72 : vector<2x2x8xf32>
    %74 = vector.shape_cast %73 : vector<2x2x8xf32> to vector<2x2x8x1xf32>
    %75 = vector.shape_cast %20 : vector<2x8x128xf32> to vector<1x2x8x128xf32>
    %76 = vector.broadcast %74 : vector<2x2x8x1xf32> to vector<2x2x8x128xf32>
    %77 = vector.broadcast %75 : vector<1x2x8x128xf32> to vector<2x2x8x128xf32>
    %78 = arith.mulf %76, %77 : vector<2x2x8x128xf32>
    %cst_26 = arith.constant dense<0.000000e+00> : vector<2x2x128xf32>
    %79 = vector.multi_reduction <add>, %78, %cst_26 [2] : vector<2x2x8x128xf32> to vector<2x2x128xf32>
    %80 = vector.shape_cast %62 : vector<2x128xf32> to vector<1x2x128xf32>
    %81 = vector.shape_cast %80 : vector<1x2x128xf32> to vector<1x2x128xf32>
    %82 = vector.broadcast %81 : vector<1x2x128xf32> to vector<2x2x128xf32>
    "tpu.trace_start"() <{level = 10 : i32, message = "pgo,pso->pgs"}> : () -> ()
    %cst_27 = arith.constant dense<0.000000e+00> : vector<2x2x8xf32>
    %83 = tpu.matmul %82, %22, %cst_27 {dimension_numbers = #tpu.dot_dimension_numbers<[2], [2], [1], [1], [0, 0, 0, 1, 1, 1], [0], [0]>} : vector<2x2x128xf32>, vector<2x8x128xf32>, vector<2x2x8xf32> -> vector<2x2x8xf32>
    "tpu.trace_stop"() : () -> ()
    %cst_28 = arith.constant dense<0xFF800000> : vector<2x2xf32>
    %84 = vector.multi_reduction <maximumf>, %83, %cst_28 [2] : vector<2x2x8xf32> to vector<2x2xf32>
    %85 = vector.shape_cast %84 : vector<2x2xf32> to vector<2x2x1xf32>
    %86 = vector.broadcast %85 : vector<2x2x1xf32> to vector<2x2x8xf32>
    %87 = arith.subf %83, %86 : vector<2x2x8xf32>
    %88 = math.exp %87 : vector<2x2x8xf32>
    %cst_29 = arith.constant dense<0.000000e+00> : vector<2x2xf32>
    %89 = vector.multi_reduction <add>, %88, %cst_29 [2] : vector<2x2x8xf32> to vector<2x2xf32>
    %90 = vector.shape_cast %89 : vector<2x2xf32> to vector<2x2x1xf32>
    %91 = tpu.reciprocal %90 {approx = true} : vector<2x2x1xf32> -> vector<2x2x1xf32>
    %92 = vector.broadcast %91 : vector<2x2x1xf32> to vector<2x2x8xf32>
    %93 = arith.mulf %88, %92 : vector<2x2x8xf32>
    %94 = vector.shape_cast %93 : vector<2x2x8xf32> to vector<2x2x8x1xf32>
    %95 = vector.shape_cast %18 : vector<2x8x128xf32> to vector<2x1x8x128xf32>
    %96 = vector.broadcast %94 : vector<2x2x8x1xf32> to vector<2x2x8x128xf32>
    %97 = vector.broadcast %95 : vector<2x1x8x128xf32> to vector<2x2x8x128xf32>
    %98 = arith.mulf %96, %97 : vector<2x2x8x128xf32>
    %cst_30 = arith.constant dense<0.000000e+00> : vector<2x2x128xf32>
    %99 = vector.multi_reduction <add>, %98, %cst_30 [2] : vector<2x2x8x128xf32> to vector<2x2x128xf32>
    %c0_31 = arith.constant 0 : index
    %c0_32 = arith.constant 0 : index
    %100 = vector.load %arg4[%c0_31, %c0_32] : memref<16x128xf32, #tpu.memory_space<vmem>>, vector<2x128xf32>
    tpu.vector_store %arg4[%c0_31, %c0_32], %49 {strides = array<i32>} : memref<16x128xf32, #tpu.memory_space<vmem>>, vector<2x128xf32>,
    %101 = vector.extract_strided_slice %79 {offsets = [0, 0, 0], sizes = [1, 2, 128], strides = [1, 1, 1]} : vector<2x2x128xf32> to vector<1x2x128xf32>
    %102 = vector.shape_cast %101 : vector<1x2x128xf32> to vector<2x128xf32>
    %c2 = arith.constant 2 : index
    %c0_33 = arith.constant 0 : index
    %103 = vector.load %arg4[%c2, %c0_33] : memref<16x128xf32, #tpu.memory_space<vmem>>, vector<2x128xf32>
    tpu.vector_store %arg4[%c2, %c0_33], %102 {strides = array<i32>} : memref<16x128xf32, #tpu.memory_space<vmem>>, vector<2x128xf32>,
    %104 = vector.extract_strided_slice %79 {offsets = [1, 0, 0], sizes = [1, 2, 128], strides = [1, 1, 1]} : vector<2x2x128xf32> to vector<1x2x128xf32>
    %105 = vector.shape_cast %104 : vector<1x2x128xf32> to vector<2x128xf32>
    %c4 = arith.constant 4 : index
    %c0_34 = arith.constant 0 : index
    %106 = vector.load %arg4[%c4, %c0_34] : memref<16x128xf32, #tpu.memory_space<vmem>>, vector<2x128xf32>
    tpu.vector_store %arg4[%c4, %c0_34], %105 {strides = array<i32>} : memref<16x128xf32, #tpu.memory_space<vmem>>, vector<2x128xf32>,
    %107 = vector.extract_strided_slice %99 {offsets = [0, 0, 0], sizes = [1, 2, 128], strides = [1, 1, 1]} : vector<2x2x128xf32> to vector<1x2x128xf32>
    %108 = vector.shape_cast %107 : vector<1x2x128xf32> to vector<2x128xf32>
    %c6 = arith.constant 6 : index
    %c0_35 = arith.constant 0 : index
    %109 = vector.load %arg4[%c6, %c0_35] : memref<16x128xf32, #tpu.memory_space<vmem>>, vector<2x128xf32>
    tpu.vector_store %arg4[%c6, %c0_35], %108 {strides = array<i32>} : memref<16x128xf32, #tpu.memory_space<vmem>>, vector<2x128xf32>,
    %110 = vector.extract_strided_slice %99 {offsets = [1, 0, 0], sizes = [1, 2, 128], strides = [1, 1, 1]} : vector<2x2x128xf32> to vector<1x2x128xf32>
    %111 = vector.shape_cast %110 : vector<1x2x128xf32> to vector<2x128xf32>
    %c8 = arith.constant 8 : index
    %c0_36 = arith.constant 0 : index
    %112 = vector.load %arg4[%c8, %c0_36] : memref<16x128xf32, #tpu.memory_space<vmem>>, vector<2x128xf32>
    tpu.vector_store %arg4[%c8, %c0_36], %111 {strides = array<i32>} : memref<16x128xf32, #tpu.memory_space<vmem>>, vector<2x128xf32>,
    %c10 = arith.constant 10 : index
    %c0_37 = arith.constant 0 : index
    %113 = vector.load %arg4[%c10, %c0_37] : memref<16x128xf32, #tpu.memory_space<vmem>>, vector<2x128xf32>
    tpu.vector_store %arg4[%c10, %c0_37], %62 {strides = array<i32>} : memref<16x128xf32, #tpu.memory_space<vmem>>, vector<2x128xf32>,
    %cst_38 = arith.constant 0.000000e+00 : f32
    %114 = vector.broadcast %cst_38 : f32 to vector<4x128xf32>
    %c12 = arith.constant 12 : index
    %c0_39 = arith.constant 0 : index
    %115 = vector.load %arg4[%c12, %c0_39] : memref<16x128xf32, #tpu.memory_space<vmem>>, vector<4x128xf32>
    tpu.vector_store %arg4[%c12, %c0_39], %114 {strides = array<i32>} : memref<16x128xf32, #tpu.memory_space<vmem>>, vector<4x128xf32>,
    return
  }
}

</mosaic_0001>

<llo_original>
// kernel: att_module_forward.1
$region0: #{att_module_forward.1}
  #allocation0 [shape = 'u32[]', space=smem, size = 0x4, offset = 0x4, fixed_abs, tag = 'smem constant byte address 0x4 - core index']
  #allocation1 [shape = 'u32[72,128]{1,0:T(1,128)}', space=vmem, size = 0x9000, scoped, tag = 'internal scratch']
  %s0 = inlined_call_operand.hbm [shape: f32[32,64], index: 0, kind: input, shape index: {}]
  %s1 = inlined_call_operand.hbm [shape: f32[32,64], index: 1, kind: input, shape index: {}]
  %s2 = inlined_call_operand.hbm [shape: f32[64,384], index: 2, kind: input, shape index: {}]
  %s3 = inlined_call_operand.hbm [shape: f32[1,384], index: 3, kind: input, shape index: {}]
  %s4 = inlined_call_operand.vmem [shape: f32[16,128], index: 4, kind: output, shape index: {}]
  %s5 = sld [smem:[#allocation0]]
  $region42: #{att_module_forward.1} parent=0
    _
  %s7 = ssub.s32 1, %s5
  %s8 = scalar_select 0, %s7, %s5
  $region1: #{att_module_forward.1} parent=0
    #allocation2 [shape = 'u8[16384]{0}', space=vmem, size = 0x4000, scoped, tag = 'input window, operand 0, single buffered']
    #allocation3 [shape = 's32[1]{0}', space=sflag, size = 0x4, scoped, tag = 'scoped memory for att_module_forward.1']
    #allocation4 [shape = 'u8[16384]{0}', space=vmem, size = 0x4000, scoped, tag = 'input window, operand 1, single buffered']
    #allocation5 [shape = 's32[1]{0}', space=sflag, size = 0x4, scoped, tag = 'scoped memory for att_module_forward.1']
    #allocation6 [shape = 'u8[98304]{0}', space=vmem, size = 0x18000, scoped, tag = 'input window, operand 2, single buffered']
    #allocation7 [shape = 'u8[1536]{0}', space=vmem, size = 0x800, scoped, tag = 'input window, operand 3, single buffered']
    #allocation8 [shape = 's32[1]{0}', space=sflag, size = 0x4, scoped, tag = 'scoped memory for att_module_forward.1']
    %9 = vsyncpa [#allocation3], 0
    %10 = vsyncpa [#allocation5], 0
    %11 = vsyncpa [#allocation8], 0
    // Predicated region
    $region2: #{att_module_forward.1} parent=1 // pred_check
      _
    $region3: #{att_module_forward.1} parent=1 // pred_check_branch
      %13 = sbr.rel (0) target = $region5
    $region4: #{att_module_forward.1} parent=1 // pred_region
      %15 = vsyncadd [#allocation3], 0
      %s16 = sshll.u32 %s0, 4
      %s17 = int_to_ptr.hbm [resolvable:$true] %s16
      %s18 = sshll.u32 [#allocation2], 4
      %s19 = int_to_ptr.vmem [resolvable:$true] %s18
      %24 = dma.hbm_to_vmem [thread:$0]  %s17, 512, %s19, [#allocation3], 128, 128, 8
    $region5: #{att_module_forward.1} parent=1 // pred_fallthru
      _
    // Predicated region
    $region6: #{att_module_forward.1} parent=1 // pred_check
      _
    $region7: #{att_module_forward.1} parent=1 // pred_check_branch
      %26 = sbr.rel (0) target = $region9
    $region8: #{att_module_forward.1} parent=1 // pred_region
      %28 = vsyncadd [#allocation5], 0
      %s29 = sshll.u32 %s1, 4
      %s30 = int_to_ptr.hbm [resolvable:$true] %s29
      %s31 = sshll.u32 [#allocation4], 4
      %s32 = int_to_ptr.vmem [resolvable:$true] %s31
      %37 = dma.hbm_to_vmem [thread:$0]  %s30, 512, %s32, [#allocation5], 128, 128, 8
    $region9: #{att_module_forward.1} parent=1 // pred_fallthru
      _
    // Predicated region
    $region10: #{att_module_forward.1} parent=1 // pred_check
      _
    $region11: #{att_module_forward.1} parent=1 // pred_check_branch
      %39 = sbr.rel (0) target = $region13
    $region12: #{att_module_forward.1} parent=1 // pred_region
      %41 = vsyncadd [#allocation5], 0
      %s42 = sshll.u32 %s2, 4
      %s43 = int_to_ptr.hbm [resolvable:$true] %s42
      %s44 = sshll.u32 [#allocation6], 4
      %s45 = int_to_ptr.vmem [resolvable:$true] %s44
      %50 = dma.hbm_to_vmem [thread:$0]  %s43, 3072, %s45, [#allocation5], 384, 384, 24
    $region13: #{att_module_forward.1} parent=1 // pred_fallthru
      _
    // Predicated region
    $region14: #{att_module_forward.1} parent=1 // pred_check
      _
    $region15: #{att_module_forward.1} parent=1 // pred_check_branch
      %52 = sbr.rel (0) target = $region17
    $region16: #{att_module_forward.1} parent=1 // pred_region
      %54 = vsyncadd [#allocation8], 0
      %s56 = sshll.u32 %s3, 4
      %s57 = int_to_ptr.hbm [resolvable:$true] %s56
      %s58 = sshll.u32 [#allocation7], 4
      %s59 = int_to_ptr.vmem [resolvable:$true] %s58
      %61 = dma.hbm_to_vmem [thread:$0]  %s57, 48, %s59, [#allocation8]
    $region17: #{att_module_forward.1} parent=1 // pred_fallthru
      _
    // Predicated region
    $region18: #{att_module_forward.1} parent=1 // pred_check
      _
    $region19: #{att_module_forward.1} parent=1 // pred_check_branch
      %63 = sbr.rel (0) target = $region21
    $region20: #{att_module_forward.1} parent=1 // pred_region
      %65 = dma.done [#allocation3], 512
    $region21: #{att_module_forward.1} parent=1 // pred_fallthru
      _
    // Predicated region
    $region22: #{att_module_forward.1} parent=1 // pred_check
      _
    $region23: #{att_module_forward.1} parent=1 // pred_check_branch
      %67 = sbr.rel (0) target = $region25
    $region24: #{att_module_forward.1} parent=1 // pred_region
      %69 = dma.done [#allocation5], 512
    $region25: #{att_module_forward.1} parent=1 // pred_fallthru
      _
    // Predicated region
    $region26: #{att_module_forward.1} parent=1 // pred_check
      _
    $region27: #{att_module_forward.1} parent=1 // pred_check_branch
      %71 = sbr.rel (0) target = $region29
    $region28: #{att_module_forward.1} parent=1 // pred_region
      %73 = dma.done [#allocation5], 3072
    $region29: #{att_module_forward.1} parent=1 // pred_fallthru
      _
    // Predicated region
    $region30: #{att_module_forward.1} parent=1 // pred_check
      _
    $region31: #{att_module_forward.1} parent=1 // pred_check_branch
      %75 = sbr.rel (0) target = $region33
    $region32: #{att_module_forward.1} parent=1 // pred_region
      %77 = dma.done [#allocation8], 48
    $region33: #{att_module_forward.1} parent=1 // pred_fallthru
      _
    %v78 = vld [vmem:[#allocation2] sm:$0xff]
    %v79 = vld [vmem:[#allocation2 + $0x8] sm:$0xff]
    %v80 = vld [vmem:[#allocation2 + $0x10] sm:$0xff]
    %v81 = vld [vmem:[#allocation2 + $0x18] sm:$0xff]
    %v82 = vld [vmem:[#allocation4] sm:$0xff]
    %v83 = vld [vmem:[#allocation4 + $0x8] sm:$0xff]
    %v84 = vld [vmem:[#allocation4 + $0x10] sm:$0xff]
    %v85 = vld [vmem:[#allocation4 + $0x18] sm:$0xff]
    %v86 = vld [vmem:[#allocation6] sm:$0xff]
    %v87 = vld [vmem:[#allocation6 + $0x18] sm:$0xff]
    %v88 = vld [vmem:[#allocation6 + $0x30] sm:$0xff]
    %v89 = vld [vmem:[#allocation6 + $0x48] sm:$0xff]
    %v90 = vld [vmem:[#allocation6 + $0x60] sm:$0xff]
    %v91 = vld [vmem:[#allocation6 + $0x78] sm:$0xff]
    %v92 = vld [vmem:[#allocation6 + $0x90] sm:$0xff]
    %v93 = vld [vmem:[#allocation6 + $0xa8] sm:$0xff]
    %v94 = vld [vmem:[#allocation7] sm:$0x1]
    %v96 = vperm.slane %v94, 0
    %vm98 = vcmask 523264
    %v100 = vsel %vm98, %v78, 0
    %v103 = vsel %vm98, %v79, 0
    %v106 = vsel %vm98, %v80, 0
    %v109 = vsel %vm98, %v81, 0
    %111 = vmatpush.msra.mxu0 0.0
    %112 = vmatpush.msra.mxu0 0.0
    %113 = vmatpush.msra.mxu0 0.0
    %114 = vmatpush.msra.mxu0 0.0
    %115 = vmatpush.msra.mxu0 0.0
    %116 = vmatpush.msra.mxu0 0.0
    %117 = vmatpush.msra.mxu0 0.0
    %118 = vmatpush.msra.mxu0 0.0
    %119 = vmatpush.msra.mxu0 %v93
    %120 = vmatpush.msra.mxu0 %v92
    %121 = vmatpush.msra.mxu0 %v91
    %122 = vmatpush.msra.mxu0 %v90
    %123 = vmatpush.msra.mxu0 %v89
    %124 = vmatpush.msra.mxu0 %v88
    %125 = vmatpush.msra.mxu0 %v87
    %126 = vmatpush.msra.mxu0 %v86
    %127 = vmatmul.f32.gmra.mxu0 %v100
    %v128 = vpop.f32.mrf.mxu0
    %v129 = vadd.f32 %v96, %v128
    %130 = vmatmul.f32.gmra.mxu0 %v103
    %v131 = vpop.f32.mrf.mxu0
    %v132 = vadd.f32 %v96, %v131
    %133 = vmatmul.f32.gmra.mxu0 %v106
    %v134 = vpop.f32.mrf.mxu0
    %v135 = vadd.f32 %v96, %v134
    %136 = vmatmul.f32.gmra.mxu0 %v109
    %v137 = vpop.f32.mrf.mxu0
    %v138 = vadd.f32 %v96, %v137
    %139 = vdwg.mxu0
    %v140 = vld [vmem:[#allocation6 + $0x8] sm:$0xff]
    %v141 = vld [vmem:[#allocation6 + $0x10] sm:$0xff]
    %v142 = vld [vmem:[#allocation6 + $0x20] sm:$0xff]
    %v143 = vld [vmem:[#allocation6 + $0x28] sm:$0xff]
    %v144 = vld [vmem:[#allocation6 + $0x38] sm:$0xff]
    %v145 = vld [vmem:[#allocation6 + $0x40] sm:$0xff]
    %v146 = vld [vmem:[#allocation6 + $0x50] sm:$0xff]
    %v147 = vld [vmem:[#allocation6 + $0x58] sm:$0xff]
    %v148 = vld [vmem:[#allocation6 + $0x68] sm:$0xff]
    %v149 = vld [vmem:[#allocation6 + $0x70] sm:$0xff]
    %v150 = vld [vmem:[#allocation6 + $0x80] sm:$0xff]
    %v151 = vld [vmem:[#allocation6 + $0x88] sm:$0xff]
    %v152 = vld [vmem:[#allocation6 + $0x98] sm:$0xff]
    %v153 = vld [vmem:[#allocation6 + $0xa0] sm:$0xff]
    %v154 = vld [vmem:[#allocation6 + $0xb0] sm:$0xff]
    %v155 = vld [vmem:[#allocation6 + $0xb8] sm:$0xff]
    %v156 = vld [vmem:[#allocation7 + $0x1] sm:$0x3]
    %v158 = vperm.slane %v156, 0
    %v159 = vperm.slane %v156, 1
    %v163 = vsel %vm98, %v82, 0
    %v166 = vsel %vm98, %v83, 0
    %v169 = vsel %vm98, %v84, 0
    %v172 = vsel %vm98, %v85, 0
    %174 = vmatpush.msra.mxu0 0.0
    %175 = vmatpush.msra.mxu0 0.0
    %176 = vmatpush.msra.mxu0 0.0
    %177 = vmatpush.msra.mxu0 0.0
    %178 = vmatpush.msra.mxu0 0.0
    %179 = vmatpush.msra.mxu0 0.0
    %180 = vmatpush.msra.mxu0 0.0
    %181 = vmatpush.msra.mxu0 0.0
    %182 = vmatpush.msra.mxu0 %v154
    %183 = vmatpush.msra.mxu0 %v152
    %184 = vmatpush.msra.mxu0 %v150
    %185 = vmatpush.msra.mxu0 %v148
    %186 = vmatpush.msra.mxu0 %v146
    %187 = vmatpush.msra.mxu0 %v144
    %188 = vmatpush.msra.mxu0 %v142
    %189 = vmatpush.msra.mxu0 %v140
    %190 = vmatmul.f32.gmra.mxu0 %v163
    %v191 = vpop.f32.mrf.mxu0
    %v192 = vadd.f32 %v158, %v191
    %193 = vmatmul.f32.gmra.mxu0 %v166
    %v194 = vpop.f32.mrf.mxu0
    %v195 = vadd.f32 %v158, %v194
    %196 = vmatmul.f32.gmra.mxu0 %v169
    %v197 = vpop.f32.mrf.mxu0
    %v198 = vadd.f32 %v158, %v197
    %199 = vmatmul.f32.gmra.mxu0 %v172
    %v200 = vpop.f32.mrf.mxu0
    %v201 = vadd.f32 %v158, %v200
    %202 = vdwg.mxu0
    %203 = vmatpush.msra.mxu0 0.0
    %204 = vmatpush.msra.mxu0 0.0
    %205 = vmatpush.msra.mxu0 0.0
    %206 = vmatpush.msra.mxu0 0.0
    %207 = vmatpush.msra.mxu0 0.0
    %208 = vmatpush.msra.mxu0 0.0
    %209 = vmatpush.msra.mxu0 0.0
    %210 = vmatpush.msra.mxu0 0.0
    %211 = vmatpush.msra.mxu0 %v155
    %212 = vmatpush.msra.mxu0 %v153
    %213 = vmatpush.msra.mxu0 %v151
    %214 = vmatpush.msra.mxu0 %v149
    %215 = vmatpush.msra.mxu0 %v147
    %216 = vmatpush.msra.mxu0 %v145
    %217 = vmatpush.msra.mxu0 %v143
    %218 = vmatpush.msra.mxu0 %v141
    %219 = vmatmul.f32.gmra.mxu0 %v163
    %v220 = vpop.f32.mrf.mxu0
    %v221 = vadd.f32 %v159, %v220
    %222 = vmatmul.f32.gmra.mxu0 %v166
    %v223 = vpop.f32.mrf.mxu0
    %v224 = vadd.f32 %v159, %v223
    %225 = vmatmul.f32.gmra.mxu0 %v169
    %v226 = vpop.f32.mrf.mxu0
    %v227 = vadd.f32 %v159, %v226
    %228 = vmatmul.f32.gmra.mxu0 %v172
    %v229 = vpop.f32.mrf.mxu0
    %v230 = vadd.f32 %v159, %v229
    %231 = vdwg.mxu0
    %v232 = vrot.slane %v192, 4
    %v233 = vadd.f32 %v192, %v232
    %v234 = vrot.slane %v233, 2
    %v235 = vadd.f32 %v233, %v234
    %v236 = vrot.slane %v235, 1
    %v237 = vadd.f32 %v235, %v236
    %v238 = vrot.slane %v198, 4
    %v239 = vadd.f32 %v198, %v238
    %v240 = vrot.slane %v239, 2
    %v241 = vadd.f32 %v239, %v240
    %v242 = vrot.slane %v241, 1
    %v243 = vadd.f32 %v241, %v242
    %v244 = vrcp.pop 8.0
    %v245 = vmul.f32 8.0, %v244
    %v246 = vsub.f32 1.0, %v245
    %v247 = vmul.f32 %v244, %v246
    %v248 = vadd.f32 %v244, %v247
    %vm249 = vweird.f32 %v244
    %v250 = vsel %vm249, %v244, %v248
    %v251 = vmul.f32 %v237, %v250
    %v252 = vmul.f32 %v243, %v250
    %v253 = vrot.slane %v195, 4
    %v254 = vadd.f32 %v195, %v253
    %v255 = vrot.slane %v254, 2
    %v256 = vadd.f32 %v254, %v255
    %v257 = vrot.slane %v256, 1
    %v258 = vadd.f32 %v256, %v257
    %v259 = vrot.slane %v201, 4
    %v260 = vadd.f32 %v201, %v259
    %v261 = vrot.slane %v260, 2
    %v262 = vadd.f32 %v260, %v261
    %v263 = vrot.slane %v262, 1
    %v264 = vadd.f32 %v262, %v263
    %v265 = vmul.f32 %v258, %v250
    %v266 = vmul.f32 %v264, %v250
    %267 = vmatpush.xpose.msra.mxu0 0.0
    %268 = vmatpush.xpose.msra.mxu0 0.0
    %269 = vmatpush.xpose.msra.mxu0 0.0
    %270 = vmatpush.xpose.msra.mxu0 0.0
    %271 = vmatpush.xpose.msra.mxu0 0.0
    %272 = vmatpush.xpose.msra.mxu0 0.0
    %273 = vmatpush.xpose.msra.mxu0 0.0
    %274 = vmatpush.xpose.msra.mxu0 0.0
    %275 = vmatpush.xpose.msra.mxu0 0.0
    %276 = vmatpush.xpose.msra.mxu0 0.0
    %277 = vmatpush.xpose.msra.mxu0 0.0
    %278 = vmatpush.xpose.msra.mxu0 0.0
    %279 = vmatpush.xpose.msra.mxu0 0.0
    %280 = vmatpush.xpose.msra.mxu0 0.0
    %281 = vmatpush.xpose.msra.mxu0 0.0
    %282 = vmatpush.xpose.msra.mxu0 %v221
    %283 = vmatmul.f32.gmra.mxu0 %v251
    %v284 = vpop.f32.mrf.mxu0
    %v285 = vadd.f32 0.0, %v284
    %286 = vdwg.mxu0
    %287 = vmatpush.xpose.msra.mxu0 0.0
    %288 = vmatpush.xpose.msra.mxu0 0.0
    %289 = vmatpush.xpose.msra.mxu0 0.0
    %290 = vmatpush.xpose.msra.mxu0 0.0
    %291 = vmatpush.xpose.msra.mxu0 0.0
    %292 = vmatpush.xpose.msra.mxu0 0.0
    %293 = vmatpush.xpose.msra.mxu0 0.0
    %294 = vmatpush.xpose.msra.mxu0 0.0
    %295 = vmatpush.xpose.msra.mxu0 0.0
    %296 = vmatpush.xpose.msra.mxu0 0.0
    %297 = vmatpush.xpose.msra.mxu0 0.0
    %298 = vmatpush.xpose.msra.mxu0 0.0
    %299 = vmatpush.xpose.msra.mxu0 0.0
    %300 = vmatpush.xpose.msra.mxu0 0.0
    %301 = vmatpush.xpose.msra.mxu0 0.0
    %302 = vmatpush.xpose.msra.mxu0 %v227
    %303 = vmatmul.f32.gmra.mxu0 %v252
    %v304 = vpop.f32.mrf.mxu0
    %v305 = vadd.f32 0.0, %v304
    %306 = vdwg.mxu0
    %vm307 = vcmask 57344
    %v308 = vsel %vm307, %v285, -inf
    %309 = vmax.xlane.f32.xlu0 %v308
    %v310 = vpop.xlane.xlu0 %309
    %v311 = vsel %vm307, %v305, -inf
    %312 = vmax.xlane.f32.xlu0 %v311
    %v313 = vpop.xlane.xlu0 %312
    %v314 = vsub.f32 %v285, %v310
    %v315 = vsub.f32 %v305, %v313
    %v316 = vmul.f32 %v314, 1.442695
    %v317 = vpow.pop %v316
    %v318 = vmul.f32 %v315, 1.442695
    %v319 = vpow.pop %v318
    %v320 = vsel %vm307, %v317, 0.0
    %321 = vadd.xlane.f32.xlu0 %v320
    %v322 = vpop.xlane.xlu0 %321
    %v323 = vsel %vm307, %v319, 0.0
    %324 = vadd.xlane.f32.xlu0 %v323
    %v325 = vpop.xlane.xlu0 %324
    %v326 = vrcp.pop %v322
    %v327 = vrcp.pop %v325
    %v328 = vmul.f32 %v317, %v326
    %v329 = vmul.f32 %v319, %v327
    %vm330 = vcmask 64512
    %v332 = vsel %vm330, %v328, 0
    %334 = vmatpush.msra.mxu0 0.0
    %335 = vmatpush.msra.mxu0 0.0
    %336 = vmatpush.msra.mxu0 0.0
    %337 = vmatpush.msra.mxu0 0.0
    %338 = vmatpush.msra.mxu0 0.0
    %339 = vmatpush.msra.mxu0 0.0
    %340 = vmatpush.msra.mxu0 0.0
    %341 = vmatpush.msra.mxu0 0.0
    %342 = vmatpush.msra.mxu0 0.0
    %343 = vmatpush.msra.mxu0 0.0
    %344 = vmatpush.msra.mxu0 0.0
    %345 = vmatpush.msra.mxu0 0.0
    %346 = vmatpush.msra.mxu0 0.0
    %347 = vmatpush.msra.mxu0 0.0
    %348 = vmatpush.msra.mxu0 0.0
    %349 = vmatpush.msra.mxu0 %v129
    %350 = vmatmul.f32.gmra.mxu0 %v332
    %v351 = vpop.f32.mrf.mxu0
    %v352 = vadd.f32 0.0, %v351
    %353 = vdwg.mxu0
    %v355 = vsel %vm330, %v329, 0
    %357 = vmatpush.msra.mxu0 0.0
    %358 = vmatpush.msra.mxu0 0.0
    %359 = vmatpush.msra.mxu0 0.0
    %360 = vmatpush.msra.mxu0 0.0
    %361 = vmatpush.msra.mxu0 0.0
    %362 = vmatpush.msra.mxu0 0.0
    %363 = vmatpush.msra.mxu0 0.0
    %364 = vmatpush.msra.mxu0 0.0
    %365 = vmatpush.msra.mxu0 0.0
    %366 = vmatpush.msra.mxu0 0.0
    %367 = vmatpush.msra.mxu0 0.0
    %368 = vmatpush.msra.mxu0 0.0
    %369 = vmatpush.msra.mxu0 0.0
    %370 = vmatpush.msra.mxu0 0.0
    %371 = vmatpush.msra.mxu0 0.0
    %372 = vmatpush.msra.mxu0 %v135
    %373 = vmatmul.f32.gmra.mxu0 %v355
    %v374 = vpop.f32.mrf.mxu0
    %v375 = vadd.f32 0.0, %v374
    %376 = vdwg.mxu0
    %377 = vmatpush.xpose.msra.mxu0 0.0
    %378 = vmatpush.xpose.msra.mxu0 0.0
    %379 = vmatpush.xpose.msra.mxu0 0.0
    %380 = vmatpush.xpose.msra.mxu0 0.0
    %381 = vmatpush.xpose.msra.mxu0 0.0
    %382 = vmatpush.xpose.msra.mxu0 0.0
    %383 = vmatpush.xpose.msra.mxu0 0.0
    %384 = vmatpush.xpose.msra.mxu0 0.0
    %385 = vmatpush.xpose.msra.mxu0 0.0
    %386 = vmatpush.xpose.msra.mxu0 0.0
    %387 = vmatpush.xpose.msra.mxu0 0.0
    %388 = vmatpush.xpose.msra.mxu0 0.0
    %389 = vmatpush.xpose.msra.mxu0 0.0
    %390 = vmatpush.xpose.msra.mxu0 0.0
    %391 = vmatpush.xpose.msra.mxu0 0.0
    %392 = vmatpush.xpose.msra.mxu0 %v224
    %393 = vmatmul.f32.gmra.mxu0 %v265
    %v394 = vpop.f32.mrf.mxu0
    %v395 = vadd.f32 0.0, %v394
    %396 = vdwg.mxu0
    %397 = vmatpush.xpose.msra.mxu0 0.0
    %398 = vmatpush.xpose.msra.mxu0 0.0
    %399 = vmatpush.xpose.msra.mxu0 0.0
    %400 = vmatpush.xpose.msra.mxu0 0.0
    %401 = vmatpush.xpose.msra.mxu0 0.0
    %402 = vmatpush.xpose.msra.mxu0 0.0
    %403 = vmatpush.xpose.msra.mxu0 0.0
    %404 = vmatpush.xpose.msra.mxu0 0.0
    %405 = vmatpush.xpose.msra.mxu0 0.0
    %406 = vmatpush.xpose.msra.mxu0 0.0
    %407 = vmatpush.xpose.msra.mxu0 0.0
    %408 = vmatpush.xpose.msra.mxu0 0.0
    %409 = vmatpush.xpose.msra.mxu0 0.0
    %410 = vmatpush.xpose.msra.mxu0 0.0
    %411 = vmatpush.xpose.msra.mxu0 0.0
    %412 = vmatpush.xpose.msra.mxu0 %v230
    %413 = vmatmul.f32.gmra.mxu0 %v266
    %v414 = vpop.f32.mrf.mxu0
    %v415 = vadd.f32 0.0, %v414
    %416 = vdwg.mxu0
    %v417 = vsel %vm307, %v395, -inf
    %418 = vmax.xlane.f32.xlu0 %v417
    %v419 = vpop.xlane.xlu0 %418
    %v420 = vsel %vm307, %v415, -inf
    %421 = vmax.xlane.f32.xlu0 %v420
    %v422 = vpop.xlane.xlu0 %421
    %v423 = vsub.f32 %v395, %v419
    %v424 = vsub.f32 %v415, %v422
    %v425 = vmul.f32 %v423, 1.442695
    %v426 = vpow.pop %v425
    %v427 = vmul.f32 %v424, 1.442695
    %v428 = vpow.pop %v427
    %v429 = vsel %vm307, %v426, 0.0
    %430 = vadd.xlane.f32.xlu0 %v429
    %v431 = vpop.xlane.xlu0 %430
    %v432 = vsel %vm307, %v428, 0.0
    %433 = vadd.xlane.f32.xlu0 %v432
    %v434 = vpop.xlane.xlu0 %433
    %v435 = vrcp.pop %v431
    %v436 = vrcp.pop %v434
    %v437 = vmul.f32 %v426, %v435
    %v438 = vmul.f32 %v428, %v436
    %v440 = vsel %vm330, %v437, 0
    %442 = vmatpush.msra.mxu0 0.0
    %443 = vmatpush.msra.mxu0 0.0
    %444 = vmatpush.msra.mxu0 0.0
    %445 = vmatpush.msra.mxu0 0.0
    %446 = vmatpush.msra.mxu0 0.0
    %447 = vmatpush.msra.mxu0 0.0
    %448 = vmatpush.msra.mxu0 0.0
    %449 = vmatpush.msra.mxu0 0.0
    %450 = vmatpush.msra.mxu0 0.0
    %451 = vmatpush.msra.mxu0 0.0
    %452 = vmatpush.msra.mxu0 0.0
    %453 = vmatpush.msra.mxu0 0.0
    %454 = vmatpush.msra.mxu0 0.0
    %455 = vmatpush.msra.mxu0 0.0
    %456 = vmatpush.msra.mxu0 0.0
    %457 = vmatpush.msra.mxu0 %v132
    %458 = vmatmul.f32.gmra.mxu0 %v440
    %v459 = vpop.f32.mrf.mxu0
    %v460 = vadd.f32 0.0, %v459
    %461 = vdwg.mxu0
    %v463 = vsel %vm330, %v438, 0
    %465 = vmatpush.msra.mxu0 0.0
    %466 = vmatpush.msra.mxu0 0.0
    %467 = vmatpush.msra.mxu0 0.0
    %468 = vmatpush.msra.mxu0 0.0
    %469 = vmatpush.msra.mxu0 0.0
    %470 = vmatpush.msra.mxu0 0.0
    %471 = vmatpush.msra.mxu0 0.0
    %472 = vmatpush.msra.mxu0 0.0
    %473 = vmatpush.msra.mxu0 0.0
    %474 = vmatpush.msra.mxu0 0.0
    %475 = vmatpush.msra.mxu0 0.0
    %476 = vmatpush.msra.mxu0 0.0
    %477 = vmatpush.msra.mxu0 0.0
    %478 = vmatpush.msra.mxu0 0.0
    %479 = vmatpush.msra.mxu0 0.0
    %480 = vmatpush.msra.mxu0 %v138
    %481 = vmatmul.f32.gmra.mxu0 %v463
    %v482 = vpop.f32.mrf.mxu0
    %v483 = vadd.f32 0.0, %v482
    %484 = vdwg.mxu0
    %vm485 = vcmask 1047556
    %v486 = vsel %vm485, 0.0, 0.0
    %v488 = vunpack.c.l.s4 1934713408
    %v489 = vunpack.c.0.s8 %v488
    %v490 = vperm.slane %v486, %v489
    %v491 = vrot.slane %v490, 4
    %v492 = vsel %vm485, 0.0, %v491
    %494 = vrot.lane.b32.xlu0 %v492, 8
    %v495 = vpop.permute.xlu0 %494
    %v497 = vsel %vm330, %v490, %v495
    %v500 = vrot.slane %v375, 7
    %vm501 = vcmask 1041409
    %v502 = vsel %vm501, %v500, %v352
    %504 = vmatpush.xpose.msra.mxu0 0.0
    %505 = vmatpush.xpose.msra.mxu0 0.0
    %506 = vmatpush.xpose.msra.mxu0 0.0
    %507 = vmatpush.xpose.msra.mxu0 0.0
    %508 = vmatpush.xpose.msra.mxu0 0.0
    %509 = vmatpush.xpose.msra.mxu0 0.0
    %510 = vmatpush.xpose.msra.mxu0 0.0
    %511 = vmatpush.xpose.msra.mxu0 0.0
    %512 = vmatpush.xpose.msra.mxu0 0.0
    %513 = vmatpush.xpose.msra.mxu0 0.0
    %514 = vmatpush.xpose.msra.mxu0 0.0
    %515 = vmatpush.xpose.msra.mxu0 0.0
    %516 = vmatpush.xpose.msra.mxu0 0.0
    %517 = vmatpush.xpose.msra.mxu0 0.0
    %518 = vmatpush.xpose.msra.mxu0 %v230
    %519 = vmatpush.xpose.msra.mxu0 %v224
    %520 = vmatmul.f32.gmra.mxu0 %v502
    %v521 = vpop.f32.mrf.mxu0
    %v522 = vadd.f32 %v497, %v521
    %523 = vdwg.mxu0
    %525 = vrot.lane.b32.xlu0 %v522, 120
    %v526 = vpop.permute.xlu0 %525
    %v528 = vrot.slane %v526, 4
    %v529 = vsel %vm485, %v528, %v522
    %v531 = vunpack.c.l.s4 1934713408
    %v532 = vunpack.c.0.s8 %v531
    %v533 = vperm.slane %v529, %v532
    %v534 = vrot.slane %v533, 4
    %v535 = vsel %vm485, 0.0, %v534
    %vm536 = vcmask 58368
    %v537 = vsel %vm536, %v533, -inf
    %538 = vmax.xlane.f32.xlu0 %v537
    %v539 = vpop.xlane.xlu0 %538
    %v540 = vsel %vm536, %v535, -inf
    %541 = vmax.xlane.f32.xlu0 %v540
    %v542 = vpop.xlane.xlu0 %541
    %v543 = vsub.f32 %v533, %v539
    %v544 = vsub.f32 %v535, %v542
    %v545 = vmul.f32 %v543, 1.442695
    %v546 = vpow.pop %v545
    %v547 = vmul.f32 %v544, 1.442695
    %v548 = vpow.pop %v547
    %v549 = vsel %vm536, %v546, 0.0
    %550 = vadd.xlane.f32.xlu0 %v549
    %v551 = vpop.xlane.xlu0 %550
    %v552 = vsel %vm536, %v548, 0.0
    %553 = vadd.xlane.f32.xlu0 %v552
    %v554 = vpop.xlane.xlu0 %553
    %v555 = vrcp.pop %v551
    %v556 = vrcp.pop %v554
    %v557 = vmul.f32 %v546, %v555
    %v558 = vmul.f32 %v548, %v556
    %v559 = vperm.slane %v557, 0
    %v560 = vlaneseq
    %v561 = vshrl.u32 %v560, 7
    %563 = vset.pattern.permute.xlu0 %v561
    %564 = vperm.xlu0 %563, %v559
    %v565 = vpop.permute.xlu0 %564
    %v566 = vperm.slane %v557, 1
    %v567 = vlaneseq
    %v568 = vshrl.u32 %v567, 7
    %570 = vset.pattern.permute.xlu0 %v568
    %571 = vperm.xlu0 %570, %v566
    %v572 = vpop.permute.xlu0 %571
    %v573 = vperm.slane %v558, 0
    %v574 = vlaneseq
    %v575 = vshrl.u32 %v574, 7
    %577 = vset.pattern.permute.xlu0 %v575
    %578 = vperm.xlu0 %577, %v573
    %v579 = vpop.permute.xlu0 %578
    %v580 = vperm.slane %v558, 1
    %v581 = vlaneseq
    %v582 = vshrl.u32 %v581, 7
    %584 = vset.pattern.permute.xlu0 %v582
    %585 = vperm.xlu0 %584, %v580
    %v586 = vpop.permute.xlu0 %585
    %v587 = vmul.f32 %v565, %v132
    %v588 = vmul.f32 %v572, %v138
    %v589 = vmul.f32 %v579, %v132
    %v590 = vmul.f32 %v586, %v138
    %v591 = vrot.slane %v587, 4
    %v592 = vadd.f32 %v587, %v591
    %v593 = vrot.slane %v592, 2
    %v594 = vadd.f32 %v592, %v593
    %v595 = vrot.slane %v594, 1
    %v596 = vadd.f32 %v594, %v595
    %v597 = vrot.slane %v588, 4
    %v598 = vadd.f32 %v588, %v597
    %v599 = vrot.slane %v598, 2
    %v600 = vadd.f32 %v598, %v599
    %v601 = vrot.slane %v600, 1
    %v602 = vadd.f32 %v600, %v601
    %v603 = vrot.slane %v589, 4
    %v604 = vadd.f32 %v589, %v603
    %v605 = vrot.slane %v604, 2
    %v606 = vadd.f32 %v604, %v605
    %v607 = vrot.slane %v606, 1
    %v608 = vadd.f32 %v606, %v607
    %v609 = vrot.slane %v590, 4
    %v610 = vadd.f32 %v590, %v609
    %v611 = vrot.slane %v610, 2
    %v612 = vadd.f32 %v610, %v611
    %v613 = vrot.slane %v612, 1
    %v614 = vadd.f32 %v612, %v613
    %v617 = vrot.slane %v483, 7
    %v618 = vsel %vm501, %v617, %v460
    %620 = vmatpush.xpose.msra.mxu0 0.0
    %621 = vmatpush.xpose.msra.mxu0 0.0
    %622 = vmatpush.xpose.msra.mxu0 0.0
    %623 = vmatpush.xpose.msra.mxu0 0.0
    %624 = vmatpush.xpose.msra.mxu0 0.0
    %625 = vmatpush.xpose.msra.mxu0 0.0
    %626 = vmatpush.xpose.msra.mxu0 0.0
    %627 = vmatpush.xpose.msra.mxu0 0.0
    %628 = vmatpush.xpose.msra.mxu0 0.0
    %629 = vmatpush.xpose.msra.mxu0 0.0
    %630 = vmatpush.xpose.msra.mxu0 0.0
    %631 = vmatpush.xpose.msra.mxu0 0.0
    %632 = vmatpush.xpose.msra.mxu0 0.0
    %633 = vmatpush.xpose.msra.mxu0 0.0
    %634 = vmatpush.xpose.msra.mxu0 0.0
    %635 = vmatpush.xpose.msra.mxu0 %v221
    %636 = vmatmul.f32.gmra.mxu0 %v618
    %v637 = vpop.f32.mrf.mxu0
    %v638 = vadd.f32 0.0, %v637
    %639 = vdwg.mxu0
    %640 = vmatpush.xpose.msra.mxu0 0.0
    %641 = vmatpush.xpose.msra.mxu0 0.0
    %642 = vmatpush.xpose.msra.mxu0 0.0
    %643 = vmatpush.xpose.msra.mxu0 0.0
    %644 = vmatpush.xpose.msra.mxu0 0.0
    %645 = vmatpush.xpose.msra.mxu0 0.0
    %646 = vmatpush.xpose.msra.mxu0 0.0
    %647 = vmatpush.xpose.msra.mxu0 0.0
    %648 = vmatpush.xpose.msra.mxu0 0.0
    %649 = vmatpush.xpose.msra.mxu0 0.0
    %650 = vmatpush.xpose.msra.mxu0 0.0
    %651 = vmatpush.xpose.msra.mxu0 0.0
    %652 = vmatpush.xpose.msra.mxu0 0.0
    %653 = vmatpush.xpose.msra.mxu0 0.0
    %654 = vmatpush.xpose.msra.mxu0 0.0
    %655 = vmatpush.xpose.msra.mxu0 %v227
    %656 = vmatmul.f32.gmra.mxu0 %v618
    %v657 = vpop.f32.mrf.mxu0
    %v658 = vadd.f32 0.0, %v657
    %659 = vdwg.mxu0
    %v660 = vsel %vm536, %v638, -inf
    %661 = vmax.xlane.f32.xlu0 %v660
    %v662 = vpop.xlane.xlu0 %661
    %v663 = vsel %vm536, %v658, -inf
    %664 = vmax.xlane.f32.xlu0 %v663
    %v665 = vpop.xlane.xlu0 %664
    %v666 = vsub.f32 %v638, %v662
    %v667 = vsub.f32 %v658, %v665
    %v668 = vmul.f32 %v666, 1.442695
    %v669 = vpow.pop %v668
    %v670 = vmul.f32 %v667, 1.442695
    %v671 = vpow.pop %v670
    %v672 = vsel %vm536, %v669, 0.0
    %673 = vadd.xlane.f32.xlu0 %v672
    %v674 = vpop.xlane.xlu0 %673
    %v675 = vsel %vm536, %v671, 0.0
    %676 = vadd.xlane.f32.xlu0 %v675
    %v677 = vpop.xlane.xlu0 %676
    %v678 = vrcp.pop %v674
    %v679 = vrcp.pop %v677
    %v680 = vmul.f32 %v669, %v678
    %v681 = vmul.f32 %v671, %v679
    %v682 = vperm.slane %v680, 0
    %v683 = vlaneseq
    %v684 = vshrl.u32 %v683, 7
    %686 = vset.pattern.permute.xlu0 %v684
    %687 = vperm.xlu0 %686, %v682
    %v688 = vpop.permute.xlu0 %687
    %v689 = vperm.slane %v680, 1
    %v690 = vlaneseq
    %v691 = vshrl.u32 %v690, 7
    %693 = vset.pattern.permute.xlu0 %v691
    %694 = vperm.xlu0 %693, %v689
    %v695 = vpop.permute.xlu0 %694
    %v696 = vperm.slane %v681, 0
    %v697 = vlaneseq
    %v698 = vshrl.u32 %v697, 7
    %700 = vset.pattern.permute.xlu0 %v698
    %701 = vperm.xlu0 %700, %v696
    %v702 = vpop.permute.xlu0 %701
    %v703 = vperm.slane %v681, 1
    %v704 = vlaneseq
    %v705 = vshrl.u32 %v704, 7
    %707 = vset.pattern.permute.xlu0 %v705
    %708 = vperm.xlu0 %707, %v703
    %v709 = vpop.permute.xlu0 %708
    %v710 = vmul.f32 %v688, %v129
    %v711 = vmul.f32 %v695, %v129
    %v712 = vmul.f32 %v702, %v135
    %v713 = vmul.f32 %v709, %v135
    %v714 = vrot.slane %v710, 4
    %v715 = vadd.f32 %v710, %v714
    %v716 = vrot.slane %v715, 2
    %v717 = vadd.f32 %v715, %v716
    %v718 = vrot.slane %v717, 1
    %v719 = vadd.f32 %v717, %v718
    %v720 = vrot.slane %v711, 4
    %v721 = vadd.f32 %v711, %v720
    %v722 = vrot.slane %v721, 2
    %v723 = vadd.f32 %v721, %v722
    %v724 = vrot.slane %v723, 1
    %v725 = vadd.f32 %v723, %v724
    %v726 = vrot.slane %v712, 4
    %v727 = vadd.f32 %v712, %v726
    %v728 = vrot.slane %v727, 2
    %v729 = vadd.f32 %v727, %v728
    %v730 = vrot.slane %v729, 1
    %v731 = vadd.f32 %v729, %v730
    %v732 = vrot.slane %v713, 4
    %v733 = vadd.f32 %v713, %v732
    %v734 = vrot.slane %v733, 2
    %v735 = vadd.f32 %v733, %v734
    %v736 = vrot.slane %v735, 1
    %v737 = vadd.f32 %v735, %v736
    %738 = vst [vmem:[%s4] sm:$0x3] %v502
    %v741 = vsel %vm501, %v602, %v596
    %743 = vst [vmem:[%s4 + $0x2] sm:$0x3] %v741
    %v746 = vsel %vm501, %v614, %v608
    %748 = vst [vmem:[%s4 + $0x4] sm:$0x3] %v746
    %v751 = vsel %vm501, %v725, %v719
    %753 = vst [vmem:[%s4 + $0x6] sm:$0x3] %v751
    %v756 = vsel %vm501, %v737, %v731
    %758 = vst [vmem:[%s4 + $0x8] sm:$0x3] %v756
    %759 = vst [vmem:[%s4 + $0xa] sm:$0x3] %v618
    %760 = vst [vmem:[%s4 + $0xc] sm:$0xf] 0.0
    // Predicated region
    $region34: #{att_module_forward.1} parent=1 // pred_check
      _
    $region35: #{att_module_forward.1} parent=1 // pred_check_branch
      %762 = sbr.rel (0) target = $region37
    $region36: #{att_module_forward.1} parent=1 // pred_region
      _
    $region37: #{att_module_forward.1} parent=1 // pred_fallthru
      _
    // Predicated region
    $region38: #{att_module_forward.1} parent=1 // pred_check
      _
    $region39: #{att_module_forward.1} parent=1 // pred_check_branch
      %764 = sbr.rel (0) target = $region41
    $region40: #{att_module_forward.1} parent=1 // pred_region
      _
    $region41: #{att_module_forward.1} parent=1 // pred_fallthru
      _
    %765 = vsyncpa [#allocation3], 1
    %766 = vsyncpa [#allocation5], 1
    %767 = vsyncpa [#allocation8], 1

</llo_original>
